<compile_context>
chip_gen: v5e
topology: v5e:2x2
jax: 0.10.0
libtpu: 0.0.40
codegen_flags: <defaults>
</compile_context>

<pallas_src>
import functools

import jax
import jax.numpy as jnp
from jax.experimental import pallas as pl
from jax.experimental.pallas import tpu as pltpu

_EPS = 1e-8  # torch.nn.CosineSimilarity default eps


def _round_up(v, m):
    return ((v + m - 1) // m) * m


def _ncm_kernel(x_ref, c_ref, o_ref, *, n_valid_classes):
    """Fused cosine-similarity + softmax for one batch tile.

    x_ref: (TB, Dp)  batch tile (f32 or bf16), zero-padded features
    c_ref: (Dp, Cp)  pre-normalized, pre-transposed centers (VMEM-resident)
    o_ref: (TB, Cp)  f32 softmax(cos) output tile
    """
    x = x_ref[...]

    # MXU: canonical (M, K) @ (K, N) contraction, f32 accumulation.
    dots = jnp.dot(x, c_ref[...], preferred_element_type=jnp.float32)  # (TB, Cp)

    # Row scale 1 / max(||x||, eps) == rsqrt(max(sum(x^2), eps^2))  (EUP).
    xf = x.astype(jnp.float32)
    x_inv = jax.lax.rsqrt(
        jnp.maximum(jnp.sum(xf * xf, axis=-1, keepdims=True), _EPS * _EPS)
    )  # (TB, 1)

    cos = dots * x_inv  # centers are already unit-norm -> this is the cosine

    # Padded class columns must not leak into the softmax denominator.
    cp = cos.shape[-1]
    if n_valid_classes < cp:
        col = jax.lax.broadcasted_iota(jnp.int32, cos.shape, 1)
        cos = jnp.where(col < n_valid_classes, cos, -1e30)

    # Numerically stable softmax over the class (lane) axis.
    m = jnp.max(cos, axis=-1, keepdims=True)
    e = jnp.exp(cos - m)
    denom = jnp.sum(e, axis=-1, keepdims=True)
    o_ref[...] = (e * pl.reciprocal(denom, approx=True)).astype(o_ref.dtype)


def _cos_kernel(x_ref, c_ref, o_ref):
    """Class-tiled fallback: cosine similarities only (softmax done outside)."""
    dots = jnp.dot(x_ref[...], c_ref[...], preferred_element_type=jnp.float32)
    xf = x_ref[...].astype(jnp.float32)
    x_inv = jax.lax.rsqrt(
        jnp.maximum(jnp.sum(xf * xf, axis=-1, keepdims=True), _EPS * _EPS)
    )
    o_ref[...] = dots * x_inv


def _vmem_plan():
    """Per-generation VMEM planning budget / scoped limit / max batch tile."""
    try:
        cap = int(pltpu.get_tpu_info().vmem_capacity_bytes)
    except Exception:
        cap = 64 * 1024 * 1024  # conservative (v7x per-core)
    if cap < 32 * 1024 * 1024:
        cap = 64 * 1024 * 1024
    # Leave headroom for compiler-internal scratch: never claim all of VMEM.
    budget = max(16 * 1024 * 1024, min(int(cap * 0.75), cap - 12 * 1024 * 1024))
    limit = max(budget, min(int(cap * 0.875), cap - 8 * 1024 * 1024))
    max_tb = 1024 if cap >= 100 * 1024 * 1024 else 512  # big tiles on v5e/v6e
    return budget, limit, max_tb


def ncm_forward(x, centers, *, use_bf16_matmul=True):
    """x: (B, feat_dim), centers: (n_classes, feat_dim).
    Returns (B, n_classes) float32 softmax(cosine-similarity) logits."""
    B, D = x.shape
    C, Dc = centers.shape
    assert D == Dc

    # Lane-dense padding: last dims -> multiples of 128.
    Dp = _round_up(D, 128)
    Cp = _round_up(C, 128)

    mxu_dtype = jnp.bfloat16 if use_bf16_matmul else jnp.float32
    ibytes = jnp.dtype(mxu_dtype).itemsize

    # Centers: normalize once in f32 (keeps values O(1) for bf16), pad,
    # transpose to the MXU-preferred (K, N) = (Dp, Cp) layout, cast once.
    cf = centers.astype(jnp.float32)
    c_norm = jnp.sqrt(jnp.sum(cf * cf, axis=-1, keepdims=True))
    c_hat = cf / jnp.maximum(c_norm, _EPS)                     # (C, D)
    if (C, D) != (Cp, Dp):
        c_hat = jnp.pad(c_hat, ((0, Cp - C), (0, Dp - D)))
    cT = jnp.transpose(c_hat).astype(mxu_dtype)                # (Dp, Cp)

    x_in = x.astype(mxu_dtype)  # stream x in the MXU dtype (bf16 halves DMA)

    vmem_budget, vmem_limit, max_tb = _vmem_plan()
    centers_vmem = Cp * Dp * ibytes  # single-buffered resident block

    def main_tile_bytes(tb):
        return (2 * tb * Dp * ibytes      # x tile, double-buffered
                + 2 * tb * Cp * 4         # f32 output tile, double-buffered
                + centers_vmem)           # resident centers

    TB = min(max_tb, _round_up(B, 8))
    while TB > 8 and main_tile_bytes(TB) > vmem_budget:
        TB = max(8, (TB // 2 // 8) * 8)

    if main_tile_bytes(TB) <= vmem_budget:
        # ---------- main path: resident centers, batch-tiled grid ----------
        if B >= 16 and _round_up(B, TB) // TB < 2:
            # Give v7x's two TensorCores at least 2 batch tiles to shard.
            TB = max(8, _round_up((B + 1) // 2, 8))
        Bp = _round_up(B, TB)
        x_pad = (x_in if (B, D) == (Bp, Dp)
                 else jnp.pad(x_in, ((0, Bp - B), (0, Dp - D))))

        # Single-buffer the grid-invariant centers block once it is large
        # enough for the VMEM saving to matter (index_map is constant, so
        # double-buffering it gains nothing).
        if centers_vmem >= (2 << 20):
            c_spec = pl.BlockSpec((Dp, Cp), lambda i: (0, 0),
                                  pipeline_mode=pl.Buffered(1))
        else:
            c_spec = pl.BlockSpec((Dp, Cp), lambda i: (0, 0))

        out = pl.pallas_call(
            functools.partial(_ncm_kernel, n_valid_classes=C),
            out_shape=jax.ShapeDtypeStruct((Bp, Cp), jnp.float32),
            grid_spec=pltpu.PrefetchScalarGridSpec(
                num_scalar_prefetch=0,
                grid=(Bp // TB,),
                in_specs=[
                    pl.BlockSpec((TB, Dp), lambda i: (i, 0)),  # x, pipelined
                    c_spec,                                    # centers, resident
                ],
                out_specs=pl.BlockSpec((TB, Cp), lambda i: (i, 0)),
            ),
            compiler_params=pltpu.CompilerParams(
                dimension_semantics=("parallel",),
                vmem_limit_bytes=int(vmem_limit),
            ),
        )(x_pad, cT)
        return out[:B, :C]

    # ---- fallback: Cp*Dp too large to be VMEM-resident -> tile classes ----
    # Cosine similarities are computed tile-by-tile in Pallas; the softmax over
    # the full class axis is a cheap lane-dense pass outside the kernel.
    # TODO(synk): add feature-dim (K) tiling with an accumulator for the case
    # where even a single (Dp, 128) centers slab exceeds the VMEM budget.
    def fb_tile_bytes(tb, tc):
        return (2 * tb * Dp * ibytes + 2 * tc * Dp * ibytes + 2 * tb * tc * 4)

    TBf = min(max_tb, _round_up(B, 8))
    TCf = min(Cp, 2048)
    while TCf > 128 and fb_tile_bytes(TBf, TCf) > vmem_budget:
        TCf = max(128, (TCf // 2 // 128) * 128)
    while TBf > 8 and fb_tile_bytes(TBf, TCf) > vmem_budget:
        TBf = max(8, (TBf // 2 // 8) * 8)

    Bp = _round_up(B, TBf)
    Cp2 = _round_up(Cp, TCf)
    x_pad = (x_in if (B, D) == (Bp, Dp)
             else jnp.pad(x_in, ((0, Bp - B), (0, Dp - D))))
    cT_pad = cT if Cp2 == Cp else jnp.pad(cT, ((0, 0), (0, Cp2 - Cp)))

    cos = pl.pallas_call(
        _cos_kernel,
        out_shape=jax.ShapeDtypeStruct((Bp, Cp2), jnp.float32),
        grid_spec=pltpu.PrefetchScalarGridSpec(
            num_scalar_prefetch=0,
            grid=(Bp // TBf, Cp2 // TCf),
            in_specs=[
                pl.BlockSpec((TBf, Dp), lambda i, j: (i, 0)),
                pl.BlockSpec((Dp, TCf), lambda i, j: (0, j)),
            ],
            out_specs=pl.BlockSpec((TBf, TCf), lambda i, j: (i, j)),
        ),
        compiler_params=pltpu.CompilerParams(
            dimension_semantics=("parallel", "parallel"),
            vmem_limit_bytes=int(vmem_limit),
        ),
    )(x_pad, cT_pad)
    return jax.nn.softmax(cos[:B, :C], axis=-1)


def _ncm_reference(x, centers):
    xn = jnp.linalg.norm(x, axis=-1, keepdims=True)
    cn = jnp.linalg.norm(centers, axis=-1, keepdims=True)
    x_hat = x / jnp.maximum(xn, _EPS)
    c_hat = centers / jnp.maximum(cn, _EPS)
    return jax.nn.softmax(x_hat @ c_hat.T, axis=-1)


if __name__ == "__main__":
    key = jax.random.PRNGKey(0)
    k_x, k_c = jax.random.split(key)

    B, n_classes, feat_dim = 8, 16, 32

    # nn.Parameter is zeros in __init__; use deterministic random values here
    # so the cosine similarities are non-degenerate.
    x = jax.random.normal(k_x, (B, feat_dim), dtype=jnp.float32)
    centers = jax.random.normal(k_c, (n_classes, feat_dim), dtype=jnp.float32)

    ref = _ncm_reference(x, centers)

    # Exact f32-MXU path: tight tolerance.
    out_f32 = ncm_forward(x, centers, use_bf16_matmul=False)
    jax.block_until_ready(out_f32)
    assert out_f32.shape == (B, n_classes)
    assert jnp.allclose(out_f32, ref, atol=2e-4, rtol=2e-4), "f32 path mismatch"

    # Default bf16-MXU perf path: relaxed tolerance (only the dot is bf16;
    # normalization and softmax stay f32).
    out_bf16 = ncm_forward(x, centers)
    jax.block_until_ready(out_bf16)
    assert out_bf16.shape == (B, n_classes)
    assert jnp.allclose(out_bf16, ref, atol=2e-2, rtol=2e-2), "bf16 path mismatch"

    print("KERNEL_OK")
</pallas_src>

<mosaic_0001>
module attributes {stable_mosaic.version = 11 : i64} {
  func.func @_ncm_kernel(%arg0: i32, %arg1: memref<8x128xf32, #tpu.memory_space<vmem>>, %arg2: memref<128x128xf32, #tpu.memory_space<vmem>>, %arg3: memref<8x128xf32, #tpu.memory_space<vmem>>) attributes {dimension_semantics = [#tpu.dimension_semantics<parallel>], iteration_bounds = array<i64: 1>, scalar_prefetch = 0 : i64, scratch_operands = 0 : i64, tpu.core_type = #tpu.core_type<tc>, window_params = [{transform_indices = @transform_0, window_bounds = array<i64: 8, 128>}, {pipeline_mode = #tpu.pipeline_mode<synchronous>, transform_indices = @transform_1, window_bounds = array<i64: 128, 128>}, {transform_indices = @transform_2, window_bounds = array<i64: 8, 128>}]} {
    %c0 = arith.constant 0 : index
    %c0_0 = arith.constant 0 : index
    %0 = vector.load %arg1[%c0, %c0_0] : memref<8x128xf32, #tpu.memory_space<vmem>>, vector<8x128xf32>
    %c0_1 = arith.constant 0 : index
    %c0_2 = arith.constant 0 : index
    %1 = vector.load %arg2[%c0_1, %c0_2] : memref<128x128xf32, #tpu.memory_space<vmem>>, vector<128x128xf32>
    %cst = arith.constant dense<0.000000e+00> : vector<8x128xf32>
    %2 = tpu.matmul %0, %1, %cst {dimension_numbers = #tpu.dot_dimension_numbers<[1], [0], [0], [1], [0, 0, 1, 1], [], []>} : vector<8x128xf32>, vector<128x128xf32>, vector<8x128xf32> -> vector<8x128xf32>
    %3 = arith.mulf %0, %0 : vector<8x128xf32>
    %cst_3 = arith.constant dense<0.000000e+00> : vector<8xf32>
    %4 = vector.multi_reduction <add>, %3, %cst_3 [1] : vector<8x128xf32> to vector<8xf32>
    %5 = vector.shape_cast %4 : vector<8xf32> to vector<8x1xf32>
    %cst_4 = arith.constant 1.000000e-16 : f32
    %6 = vector.broadcast %cst_4 : f32 to vector<8x1xf32>
    %7 = arith.maximumf %5, %6 : vector<8x1xf32>
    %8 = math.rsqrt %7 : vector<8x1xf32>
    %9 = vector.broadcast %8 : vector<8x1xf32> to vector<8x128xf32>
    %10 = arith.mulf %2, %9 : vector<8x128xf32>
    %11 = tpu.iota {dimensions = array<i32: 1>} : vector<8x128xi32>
    %c16_i32 = arith.constant 16 : i32
    %12 = vector.broadcast %c16_i32 : i32 to vector<8x128xi32>
    %13 = arith.cmpi slt, %11, %12 : vector<8x128xi32>
    %cst_5 = arith.constant -1.000000e+30 : f32
    %14 = vector.broadcast %cst_5 : f32 to vector<8x128xf32>
    %15 = arith.select %13, %10, %14 : vector<8x128xi1>, vector<8x128xf32>
    %cst_6 = arith.constant dense<0xFF800000> : vector<8xf32>
    %16 = vector.multi_reduction <maximumf>, %15, %cst_6 [1] : vector<8x128xf32> to vector<8xf32>
    %17 = vector.shape_cast %16 : vector<8xf32> to vector<8x1xf32>
    %18 = vector.broadcast %17 : vector<8x1xf32> to vector<8x128xf32>
    %19 = arith.subf %15, %18 : vector<8x128xf32>
    %20 = math.exp %19 : vector<8x128xf32>
    %cst_7 = arith.constant dense<0.000000e+00> : vector<8xf32>
    %21 = vector.multi_reduction <add>, %20, %cst_7 [1] : vector<8x128xf32> to vector<8xf32>
    %22 = vector.shape_cast %21 : vector<8xf32> to vector<8x1xf32>
    %23 = tpu.reciprocal %22 {approx = true} : vector<8x1xf32> -> vector<8x1xf32>
    %24 = vector.broadcast %23 : vector<8x1xf32> to vector<8x128xf32>
    %25 = arith.mulf %20, %24 : vector<8x128xf32>
    %c0_8 = arith.constant 0 : index
    %c0_9 = arith.constant 0 : index
    %26 = vector.load %arg3[%c0_8, %c0_9] : memref<8x128xf32, #tpu.memory_space<vmem>>, vector<8x128xf32>
    tpu.vector_store %arg3[%c0_8, %c0_9], %25 {strides = array<i32>} : memref<8x128xf32, #tpu.memory_space<vmem>>, vector<8x128xf32>,
    return
  }
  func.func @transform_0(%arg0: i32) -> (i32, i32) {
    %c0_i32 = arith.constant 0 : i32
    %c0_i32_0 = arith.constant 0 : i32
    return %arg0, %c0_i32 : i32, i32
  }
  func.func @transform_1(%arg0: i32) -> (i32, i32) {
    %c0_i32 = arith.constant 0 : i32
    %c0_i32_0 = arith.constant 0 : i32
    %c0_i32_1 = arith.constant 0 : i32
    return %c0_i32, %c0_i32_0 : i32, i32
  }
  func.func @transform_2(%arg0: i32) -> (i32, i32) {
    %c0_i32 = arith.constant 0 : i32
    %c0_i32_0 = arith.constant 0 : i32
    return %arg0, %c0_i32 : i32, i32
  }
}

</mosaic_0001>

<llo_original>
// kernel: tpu_custom_call.1
$region0: #{tpu_custom_call.1}
  #allocation0 [shape = 'u32[]', space=smem, size = 0x4, offset = 0x4, fixed_abs, tag = 'smem constant byte address 0x4 - core index']
  #allocation1 [shape = 'u32[72,128]{1,0:T(1,128)}', space=vmem, size = 0x9000, scoped, tag = 'internal scratch']
  %s0 = inlined_call_operand.hbm [shape: f32[8,128], index: 0, kind: input, shape index: {}]
  %s1 = inlined_call_operand.hbm [shape: f32[128,128], index: 1, kind: input, shape index: {}]
  %s2 = inlined_call_operand.hbm [shape: f32[8,128], index: 2, kind: output, shape index: {}]
  %s3 = sld [smem:[#allocation0]]
  $region26: #{tpu_custom_call.1} parent=0
    _
  %s5 = ssub.s32 1, %s3
  %s6 = scalar_select 0, %s5, %s3
  $region1: #{tpu_custom_call.1} parent=0
    #allocation2 [shape = 'u8[4096]{0}', space=vmem, size = 0x1000, scoped, tag = 'input window, operand 0, single buffered']
    #allocation3 [shape = 's32[1]{0}', space=sflag, size = 0x4, scoped, tag = 'scoped memory for tpu_custom_call.1']
    #allocation4 [shape = 's32[1]{0}', space=sflag, size = 0x4, scoped, tag = 'scoped memory for tpu_custom_call.1']
    #allocation5 [shape = 'u8[65536]{0}', space=vmem, size = 0x10000, scoped, tag = 'input window, operand 1, single buffered']
    #allocation6 [shape = 's32[1]{0}', space=sflag, size = 0x4, scoped, tag = 'scoped memory for tpu_custom_call.1']
    #allocation7 [shape = 'u8[4096]{0}', space=vmem, size = 0x1000, scoped, tag = 'output window, operand 0, single buffered']
    %7 = vsyncpa [#allocation3], 0
    %8 = vsyncpa [#allocation6], 0
    %9 = vsyncpa [#allocation4], 0
    // Predicated region
    $region2: #{tpu_custom_call.1} parent=1 // pred_check
      _
    $region3: #{tpu_custom_call.1} parent=1 // pred_check_branch
      %11 = sbr.rel (0) target = $region5
    $region4: #{tpu_custom_call.1} parent=1 // pred_region
      %13 = vsyncadd [#allocation3], 0
      %s15 = sshll.u32 %s0, 4
      %s16 = int_to_ptr.hbm [resolvable:$true] %s15
      %s17 = sshll.u32 [#allocation2], 4
      %s18 = int_to_ptr.vmem [resolvable:$true] %s17
      %20 = dma.hbm_to_vmem [thread:$0]  %s16, 128, %s18, [#allocation3]
    $region5: #{tpu_custom_call.1} parent=1 // pred_fallthru
      _
    // Predicated region
    $region6: #{tpu_custom_call.1} parent=1 // pred_check
      _
    $region7: #{tpu_custom_call.1} parent=1 // pred_check_branch
      %22 = sbr.rel (0) target = $region9
    $region8: #{tpu_custom_call.1} parent=1 // pred_region
      %24 = vsyncadd [#allocation6], 0
      %s25 = sshll.u32 %s1, 4
      %s26 = int_to_ptr.hbm [resolvable:$true] %s25
      %s27 = sshll.u32 [#allocation5], 4
      %s28 = int_to_ptr.vmem [resolvable:$true] %s27
      %33 = dma.hbm_to_vmem [thread:$0]  %s26, 2048, %s28, [#allocation6], 128, 128, 8
    $region9: #{tpu_custom_call.1} parent=1 // pred_fallthru
      _
    // Predicated region
    $region10: #{tpu_custom_call.1} parent=1 // pred_check
      _
    $region11: #{tpu_custom_call.1} parent=1 // pred_check_branch
      %35 = sbr.rel (0) target = $region13
    $region12: #{tpu_custom_call.1} parent=1 // pred_region
      %37 = dma.done [#allocation3], 128
    $region13: #{tpu_custom_call.1} parent=1 // pred_fallthru
      _
    // Predicated region
    $region14: #{tpu_custom_call.1} parent=1 // pred_check
      _
    $region15: #{tpu_custom_call.1} parent=1 // pred_check_branch
      %39 = sbr.rel (0) target = $region17
    $region16: #{tpu_custom_call.1} parent=1 // pred_region
      %41 = dma.done [#allocation6], 2048
    $region17: #{tpu_custom_call.1} parent=1 // pred_fallthru
      _
    %v42 = vld [vmem:[#allocation2] sm:$0xff]
    %v43 = vld [vmem:[#allocation5] sm:$0xff]
    %v44 = vld [vmem:[#allocation5 + $0x8] sm:$0xff]
    %v45 = vld [vmem:[#allocation5 + $0x10] sm:$0xff]
    %v46 = vld [vmem:[#allocation5 + $0x18] sm:$0xff]
    %v47 = vld [vmem:[#allocation5 + $0x20] sm:$0xff]
    %v48 = vld [vmem:[#allocation5 + $0x28] sm:$0xff]
    %v49 = vld [vmem:[#allocation5 + $0x30] sm:$0xff]
    %v50 = vld [vmem:[#allocation5 + $0x38] sm:$0xff]
    %v51 = vld [vmem:[#allocation5 + $0x40] sm:$0xff]
    %v52 = vld [vmem:[#allocation5 + $0x48] sm:$0xff]
    %v53 = vld [vmem:[#allocation5 + $0x50] sm:$0xff]
    %v54 = vld [vmem:[#allocation5 + $0x58] sm:$0xff]
    %v55 = vld [vmem:[#allocation5 + $0x60] sm:$0xff]
    %v56 = vld [vmem:[#allocation5 + $0x68] sm:$0xff]
    %v57 = vld [vmem:[#allocation5 + $0x70] sm:$0xff]
    %v58 = vld [vmem:[#allocation5 + $0x78] sm:$0xff]
    %59 = vmatpush.msra.mxu0 %v58
    %60 = vmatpush.msra.mxu0 %v57
    %61 = vmatpush.msra.mxu0 %v56
    %62 = vmatpush.msra.mxu0 %v55
    %63 = vmatpush.msra.mxu0 %v54
    %64 = vmatpush.msra.mxu0 %v53
    %65 = vmatpush.msra.mxu0 %v52
    %66 = vmatpush.msra.mxu0 %v51
    %67 = vmatpush.msra.mxu0 %v50
    %68 = vmatpush.msra.mxu0 %v49
    %69 = vmatpush.msra.mxu0 %v48
    %70 = vmatpush.msra.mxu0 %v47
    %71 = vmatpush.msra.mxu0 %v46
    %72 = vmatpush.msra.mxu0 %v45
    %73 = vmatpush.msra.mxu0 %v44
    %74 = vmatpush.msra.mxu0 %v43
    %75 = vmatmul.f32.gmra.mxu0 %v42
    %v76 = vpop.f32.mrf.mxu0
    %v77 = vadd.f32 0.0, %v76
    %78 = vdwg.mxu0
    %v79 = vmul.f32 %v42, %v42
    %80 = vadd.xlane.f32.xlu0 %v79
    %v81 = vpop.xlane.xlu0 %80
    %v82 = vmax.f32 %v81, 1e-16
    %v83 = vrsqrt.pop %v82
    %v84 = vmul.f32 %v83, %v82
    %v85 = vmul.f32 %v84, %v83
    %v86 = vmul.f32 0.5, %v85
    %v87 = vsub.f32 1.5, %v86
    %v88 = vmul.f32 %v83, %v87
    %vm89 = vweird.f32 %v82
    %vm90 = vweird.f32 %v83
    %vm91 = vmor %vm89, %vm90
    %v92 = vsel %vm91, %v83, %v88
    %v93 = vmul.f32 %v77, %v92
    %v94 = vlaneseq
    %v95 = vand.u32 %v94, 127
    %vm96 = vcmp.lt.s32.totalorder %v95, 16
    %v97 = vsel %vm96, %v93, -1e+30
    %98 = vmax.xlane.f32.xlu0 %v97
    %v99 = vpop.xlane.xlu0 %98
    %v100 = vsub.f32 %v97, %v99
    %v101 = vmul.f32 %v100, 1.442695
    %v102 = vpow.pop %v101
    %103 = vadd.xlane.f32.xlu0 %v102
    %v104 = vpop.xlane.xlu0 %103
    %v105 = vrcp.pop %v104
    %v106 = vmul.f32 %v102, %v105
    %107 = vst [vmem:[#allocation7] sm:$0xff] %v106
    // Predicated region
    $region18: #{tpu_custom_call.1} parent=1 // pred_check
      _
    $region19: #{tpu_custom_call.1} parent=1 // pred_check_branch
      %109 = sbr.rel (0) target = $region21
    $region20: #{tpu_custom_call.1} parent=1 // pred_region
      %111 = vsyncadd [#allocation4], 0
      %s113 = sshll.u32 [#allocation7], 4
      %s114 = int_to_ptr.vmem [resolvable:$true] %s113
      %s115 = sshll.u32 %s2, 4
      %s116 = int_to_ptr.hbm [resolvable:$true] %s115
      %118 = dma.vmem_to_hbm [thread:$0]  %s114, 128, %s116, [#allocation4]
    $region21: #{tpu_custom_call.1} parent=1 // pred_fallthru
      _
    // Predicated region
    $region22: #{tpu_custom_call.1} parent=1 // pred_check
      _
    $region23: #{tpu_custom_call.1} parent=1 // pred_check_branch
      %120 = sbr.rel (0) target = $region25
    $region24: #{tpu_custom_call.1} parent=1 // pred_region
      %122 = dma.done [#allocation4], 128
    $region25: #{tpu_custom_call.1} parent=1 // pred_fallthru
      _
    %123 = vsyncpa [#allocation3], 1
    %124 = vsyncpa [#allocation6], 1
    %125 = vsyncpa [#allocation4], 1

</llo_original>
